<compile_context>
chip_gen: v7x
topology: tpu7x:2x2x1
jax: 0.10.0
libtpu: 0.0.40
codegen_flags: <defaults>
</compile_context>

<pallas_src>
import functools

import jax
import jax.numpy as jnp
from jax import lax
from jax.experimental import pallas as pl
from jax.experimental.pallas import tpu as pltpu


def _round_down(x, m):
    return (x // m) * m


def _round_up(x, m):
    return ((x + m - 1) // m) * m


def ann_kernel(x_ref, w1_ref, b1_ref, w2_ref, b2_ref, o_ref):
    """Linear_1 -> ReLU -> Linear_2, computed transposed so every intermediate
    is lane-dense along the batch axis."""
    x = x_ref[...]                                              # (bm, X_dim)

    # h^T = W1 @ x^T : contract the X_dim (last) axis of both operands.
    # Native "A @ B^T" MXU form (same pattern as q @ k^T), so the big x tile is
    # consumed in its natural (bm, X_dim) layout and the (inner, bm) result is
    # lane-dense along the batch (bm/128 vregs instead of bm/8).
    h_t = lax.dot_general(
        w1_ref[...], x,
        dimension_numbers=(((1,), (1,)), ((), ())),
        preferred_element_type=jnp.float32)                     # (inner, bm)
    h_t = jnp.maximum(h_t + b1_ref[...], 0.0)                   # b1 is (inner, 1), ReLU in f32

    # y = W2 @ h^T : standard (1, inner) @ (inner, bm) matmul -> (1, bm).
    # Lane-dense result -> wide unmasked store into the (1, bm) output tile.
    y = jnp.dot(w2_ref[...], h_t, preferred_element_type=jnp.float32)
    o_ref[...] = (y + b2_ref[0]).astype(o_ref.dtype)            # b2 scalar from SMEM


def _select_bm(B, X_dim, itemsize, block_m):
    """Pick the batch tile: bytes-targeted, lane-padding aware, >=2 blocks."""
    if B <= 128:
        return B                                    # single block == full array dims
    raw_row = X_dim * itemsize                      # HBM bytes actually moved per row
    padded_row = _round_up(X_dim, 128) * itemsize   # VMEM bytes the row occupies (lane padded)
    # ~2 MiB of HBM traffic per grid step amortizes the ~0.35us step overhead
    # (v7x needs the most: 0.35us @ 3.2 TB/s ~= 1.1 MB of lost transfer).
    bm = _round_down((2 << 20) // raw_row, 128)
    # Double-buffered, lane-padded x tiles must stay well inside v7x's 64 MiB VMEM.
    bm = min(bm, _round_down((32 << 20) // (2 * padded_row), 128))
    # Keep at least 2 grid blocks so the ("parallel",) axis can shard across
    # both TensorCores on v7x megacore.
    bm = min(bm, _round_up(pl.cdiv(B, 2), 128))
    bm = max(128, bm)
    if block_m is not None:                         # optional user cap (mostly for tests)
        bm = max(128, min(bm, _round_down(block_m, 128)))
    return bm


@functools.partial(jax.jit, static_argnames=("block_m",))
def ann_forward_pallas(x, w1, b1, w2, b2, *, block_m=None):
    """Pallas forward.  Params in PyTorch layout:
       w1: (inner, X_dim), b1: (inner,), w2: (1, inner), b2: (1,)."""
    B, X_dim = x.shape
    inner_dim = w1.shape[0]
    itemsize = jnp.dtype(x.dtype).itemsize

    bm = _select_bm(B, X_dim, itemsize, block_m)
    num_blocks = pl.cdiv(B, bm)
    out_cols = num_blocks * bm

    b1_col = b1.reshape(inner_dim, 1)

    # Explicit VMEM budget from the *padded* footprint (narrow X_dim tiles are
    # stored 128-lane padded), capped at 48 MiB so it is safe on v7x (64 MiB).
    padded_lanes = _round_up(X_dim, 128)
    need = (2 * bm * padded_lanes * itemsize          # double-buffered x tiles
            + 2 * 8 * bm * itemsize                   # double-buffered (1, bm) out tiles (8-sublane padded)
            + 6 * 8 * max(padded_lanes, 128) * 4)     # small resident weight/bias tiles
    vmem_limit = int(min(max(need + (4 << 20), 16 << 20), 48 << 20))

    cost = pl.CostEstimate(
        flops=2 * B * X_dim * inner_dim + 2 * B * inner_dim,
        transcendentals=0,
        bytes_accessed=(B * X_dim * itemsize + B * itemsize
                        + (inner_dim * X_dim + 2 * inner_dim + 1) * itemsize),
    )

    out2d = pl.pallas_call(
        ann_kernel,
        out_shape=jax.ShapeDtypeStruct((1, out_cols), x.dtype),
        grid_spec=pltpu.PrefetchScalarGridSpec(
            num_scalar_prefetch=0,
            grid=(num_blocks,),
            in_specs=[
                pl.BlockSpec((bm, X_dim), lambda i: (i, 0)),            # x tile
                pl.BlockSpec((inner_dim, X_dim), lambda i: (0, 0)),     # W1 (PyTorch layout, resident)
                pl.BlockSpec((inner_dim, 1), lambda i: (0, 0)),         # b1 column (resident)
                pl.BlockSpec((1, inner_dim), lambda i: (0, 0)),         # W2 (resident)
                pl.BlockSpec(memory_space=pltpu.MemorySpace.SMEM),      # b2 scalar in SMEM
            ],
            out_specs=pl.BlockSpec((1, bm), lambda i: (0, i)),          # lane-dense slab
        ),
        compiler_params=pltpu.CompilerParams(
            dimension_semantics=("parallel",),
            vmem_limit_bytes=vmem_limit,
        ),
        cost_estimate=cost,
    )(x, w1, b1_col, w2, b2)

    # Drop the padded columns of the (possibly partial) last tile; restore (B, 1).
    return out2d[0, :B].reshape(B, 1)


def ann_reference(x, w1, b1, w2, b2):
    h = jnp.maximum(x @ w1.T + b1, 0.0)
    return h @ w2.T + b2


_ann_reference_jit = jax.jit(ann_reference)


def ann_forward(x, w1, b1, w2, b2, *, block_m=None, min_pallas_batch=1024):
    """Dispatcher: tiny batches are launch/step-overhead bound -> plain XLA."""
    if x.shape[0] < min_pallas_batch:
        return _ann_reference_jit(x, w1, b1, w2, b2)
    return ann_forward_pallas(x, w1, b1, w2, b2, block_m=block_m)


def init_ann_params(key, X_dim, inner_dim=8, dtype=jnp.float32):
    # PyTorch nn.Linear default init: U(-1/sqrt(fan_in), 1/sqrt(fan_in)),
    # parameters kept in PyTorch layout.
    k1, k2, k3, k4 = jax.random.split(key, 4)
    bound1 = 1.0 / (X_dim ** 0.5)
    bound2 = 1.0 / (inner_dim ** 0.5)
    w1 = jax.random.uniform(k1, (inner_dim, X_dim), dtype, -bound1, bound1)
    b1 = jax.random.uniform(k2, (inner_dim,), dtype, -bound1, bound1)
    w2 = jax.random.uniform(k3, (1, inner_dim), dtype, -bound2, bound2)
    b2 = jax.random.uniform(k4, (1,), dtype, -bound2, bound2)
    return w1, b1, w2, b2


if __name__ == "__main__":
    key = jax.random.PRNGKey(0)
    kx1, kx2, kx3, kp = jax.random.split(key, 4)

    X_dim, inner_dim = 32, 8
    w1, b1, w2, b2 = init_ann_params(kp, X_dim, inner_dim)

    # Case 1: small batch -> single full-array block path.
    B1 = 8
    x1 = jax.random.normal(kx1, (B1, X_dim), dtype=jnp.float32)
    out1 = jax.block_until_ready(ann_forward_pallas(x1, w1, b1, w2, b2))
    ref1 = ann_reference(x1, w1, b1, w2, b2)
    assert out1.shape == (B1, 1), out1.shape
    assert jnp.allclose(out1, ref1, atol=1e-4, rtol=1e-4), "mismatch vs reference (B=8)"

    # Case 2: forced small tile -> multi-block grid with a partial last tile.
    B2 = 260
    x2 = jax.random.normal(kx2, (B2, X_dim), dtype=jnp.float32)
    out2 = jax.block_until_ready(ann_forward_pallas(x2, w1, b1, w2, b2, block_m=128))
    ref2 = ann_reference(x2, w1, b1, w2, b2)
    assert out2.shape == (B2, 1), out2.shape
    assert jnp.allclose(out2, ref2, atol=1e-4, rtol=1e-4), "mismatch vs reference (B=260)"

    # Case 3: dispatcher + automatic tile selection (bm=2048 here -> 2 even blocks).
    B3 = 4096
    x3 = jax.random.normal(kx3, (B3, X_dim), dtype=jnp.float32)
    out3 = jax.block_until_ready(ann_forward(x3, w1, b1, w2, b2))
    ref3 = ann_reference(x3, w1, b1, w2, b2)
    assert out3.shape == (B3, 1), out3.shape
    assert jnp.allclose(out3, ref3, atol=1e-4, rtol=1e-4), "mismatch vs reference (B=4096)"

    print("KERNEL_OK")
</pallas_src>

<mosaic_0001>
module attributes {stable_mosaic.version = 11 : i64} {
  func.func @ann_kernel(%arg0: i32, %arg1: memref<8x32xf32, #tpu.memory_space<vmem>>, %arg2: memref<8x32xf32, #tpu.memory_space<vmem>>, %arg3: memref<8x1xf32, #tpu.memory_space<vmem>>, %arg4: memref<1x8xf32, #tpu.memory_space<vmem>>, %arg5: memref<1xf32, #tpu.memory_space<smem>>, %arg6: memref<1x8xf32, #tpu.memory_space<vmem>>) attributes {dimension_semantics = [#tpu.dimension_semantics<parallel>], iteration_bounds = array<i64: 1>, scalar_prefetch = 0 : i64, scratch_operands = 0 : i64, tpu.core_type = #tpu.core_type<tc>, window_params = [{transform_indices = @transform_0, window_bounds = array<i64: 8, 32>}, {pipeline_mode = #tpu.pipeline_mode<synchronous>, transform_indices = @transform_1, window_bounds = array<i64: 8, 32>}, {pipeline_mode = #tpu.pipeline_mode<synchronous>, transform_indices = @transform_2, window_bounds = array<i64: 8, 1>}, {pipeline_mode = #tpu.pipeline_mode<synchronous>, transform_indices = @transform_3, window_bounds = array<i64: 1, 8>}, {transform_indices = @transform_4, window_bounds = array<i64: 1>}, {transform_indices = @transform_5, window_bounds = array<i64: 1, 8>}]} {
    %c0 = arith.constant 0 : index
    %c0_0 = arith.constant 0 : index
    %0 = vector.load %arg1[%c0, %c0_0] : memref<8x32xf32, #tpu.memory_space<vmem>>, vector<8x32xf32>
    %c0_1 = arith.constant 0 : index
    %c0_2 = arith.constant 0 : index
    %1 = vector.load %arg2[%c0_1, %c0_2] : memref<8x32xf32, #tpu.memory_space<vmem>>, vector<8x32xf32>
    %cst = arith.constant dense<0.000000e+00> : vector<8x8xf32>
    %2 = tpu.matmul %1, %0, %cst {dimension_numbers = #tpu.dot_dimension_numbers<[1], [1], [0], [0], [0, 0, 1, 0], [], []>} : vector<8x32xf32>, vector<8x32xf32>, vector<8x8xf32> -> vector<8x8xf32>
    %c0_3 = arith.constant 0 : index
    %c0_4 = arith.constant 0 : index
    %3 = vector.load %arg3[%c0_3, %c0_4] : memref<8x1xf32, #tpu.memory_space<vmem>>, vector<8x1xf32>
    %4 = vector.broadcast %3 : vector<8x1xf32> to vector<8x8xf32>
    %5 = arith.addf %2, %4 : vector<8x8xf32>
    %cst_5 = arith.constant 0.000000e+00 : f32
    %6 = vector.broadcast %cst_5 : f32 to vector<8x8xf32>
    %7 = arith.maximumf %5, %6 : vector<8x8xf32>
    %c0_6 = arith.constant 0 : index
    %c0_7 = arith.constant 0 : index
    %8 = vector.load %arg4[%c0_6, %c0_7] : memref<1x8xf32, #tpu.memory_space<vmem>>, vector<1x8xf32>
    %cst_8 = arith.constant dense<0.000000e+00> : vector<1x8xf32>
    %9 = tpu.matmul %8, %7, %cst_8 {dimension_numbers = #tpu.dot_dimension_numbers<[1], [0], [0], [1], [0, 0, 1, 1], [], []>} : vector<1x8xf32>, vector<8x8xf32>, vector<1x8xf32> -> vector<1x8xf32>
    %c0_9 = arith.constant 0 : index
    %10 = memref.load %arg5[%c0_9] : memref<1xf32, #tpu.memory_space<smem>>
    %11 = vector.broadcast %10 : f32 to vector<1x8xf32>
    %12 = arith.addf %9, %11 : vector<1x8xf32>
    %c0_10 = arith.constant 0 : index
    %c0_11 = arith.constant 0 : index
    %13 = vector.load %arg6[%c0_10, %c0_11] : memref<1x8xf32, #tpu.memory_space<vmem>>, vector<1x8xf32>
    tpu.vector_store %arg6[%c0_10, %c0_11], %12 {strides = array<i32>} : memref<1x8xf32, #tpu.memory_space<vmem>>, vector<1x8xf32>,
    return
  }
  func.func @transform_0(%arg0: i32) -> (i32, i32) {
    %c0_i32 = arith.constant 0 : i32
    %c0_i32_0 = arith.constant 0 : i32
    return %arg0, %c0_i32 : i32, i32
  }
  func.func @transform_1(%arg0: i32) -> (i32, i32) {
    %c0_i32 = arith.constant 0 : i32
    %c0_i32_0 = arith.constant 0 : i32
    %c0_i32_1 = arith.constant 0 : i32
    return %c0_i32, %c0_i32_0 : i32, i32
  }
  func.func @transform_2(%arg0: i32) -> (i32, i32) {
    %c0_i32 = arith.constant 0 : i32
    %c0_i32_0 = arith.constant 0 : i32
    %c0_i32_1 = arith.constant 0 : i32
    return %c0_i32, %c0_i32_0 : i32, i32
  }
  func.func @transform_3(%arg0: i32) -> (i32, i32) {
    %c0_i32 = arith.constant 0 : i32
    %c0_i32_0 = arith.constant 0 : i32
    %c0_i32_1 = arith.constant 0 : i32
    return %c0_i32, %c0_i32_0 : i32, i32
  }
  func.func @transform_4(%arg0: i32) -> i32 {
    %c0_i32 = arith.constant 0 : i32
    %c0_i32_0 = arith.constant 0 : i32
    return %c0_i32 : i32
  }
  func.func @transform_5(%arg0: i32) -> (i32, i32) {
    %c0_i32 = arith.constant 0 : i32
    %c0_i32_0 = arith.constant 0 : i32
    return %c0_i32, %arg0 : i32, i32
  }
}

</mosaic_0001>

<llo_original>
// kernel: ann_forward_pallas.1
$region0: #{ann_forward_pallas.1}
  #allocation0 [shape = 'u32[]', space=smem, size = 0x4, offset = 0x4, fixed_abs, tag = 'smem constant byte address 0x4 - core index']
  #allocation1 [shape = 'u32[144,128]{1,0:T(1,128)}', space=vmem, size = 0x12000, scoped, tag = 'internal scratch']
  #allocation2 [shape = 'f32[1]{0:T(128)S(6)}', space=smem, size = 0x200, scoped, tag = 'scoped memory for ann_forward_pallas.1']
  %s0 = inlined_call_operand.vmem [shape: f32[8,32], index: 0, kind: input, shape index: {}]
  %s1 = inlined_call_operand.vmem [shape: f32[8,32], index: 1, kind: input, shape index: {}]
  %s2 = inlined_call_operand.vmem [shape: f32[8,1], index: 2, kind: input, shape index: {}]
  %s3 = inlined_call_operand.vmem [shape: f32[1,8], index: 3, kind: input, shape index: {}]
  %s4 = inlined_call_operand.<no memory space> [shape: f32[1], index: 4, kind: input, shape index: {}]
  %s5 = inlined_call_operand.hbm [shape: f32[1,8], index: 5, kind: output, shape index: {}]
  %s6 = sld [smem:[#allocation0]]
  $region30: #{ann_forward_pallas.1} parent=0
    _
  %s8 = ssub.s32 1, %s6
  %s9 = scalar_select 0, %s8, %s6
  %10 = sst [smem:[#allocation2]] %s4
  $region1: #{ann_forward_pallas.1} parent=0
    #allocation3 [shape = 'u8[512]{0}', space=vmem, size = 0x400, scoped, tag = 'output window, operand 0, single buffered']
    #allocation4 [shape = 's32[1]{0}', space=sflag, size = 0x4, scoped, tag = 'scoped memory for ann_forward_pallas.1']
    %11 = vsyncpa [#allocation4], 0
    // Predicated region
    $region2: #{ann_forward_pallas.1} parent=1 // pred_check
      _
    $region3: #{ann_forward_pallas.1} parent=1 // pred_check_branch
      %13 = sbr.rel (0) target = $region5
    $region4: #{ann_forward_pallas.1} parent=1 // pred_region
      _
    $region5: #{ann_forward_pallas.1} parent=1 // pred_fallthru
      _
    // Predicated region
    $region6: #{ann_forward_pallas.1} parent=1 // pred_check
      _
    $region7: #{ann_forward_pallas.1} parent=1 // pred_check_branch
      %15 = sbr.rel (0) target = $region9
    $region8: #{ann_forward_pallas.1} parent=1 // pred_region
      _
    $region9: #{ann_forward_pallas.1} parent=1 // pred_fallthru
      _
    // Predicated region
    $region10: #{ann_forward_pallas.1} parent=1 // pred_check
      _
    $region11: #{ann_forward_pallas.1} parent=1 // pred_check_branch
      %17 = sbr.rel (0) target = $region13
    $region12: #{ann_forward_pallas.1} parent=1 // pred_region
      _
    $region13: #{ann_forward_pallas.1} parent=1 // pred_fallthru
      _
    // Predicated region
    $region14: #{ann_forward_pallas.1} parent=1 // pred_check
      _
    $region15: #{ann_forward_pallas.1} parent=1 // pred_check_branch
      %19 = sbr.rel (0) target = $region17
    $region16: #{ann_forward_pallas.1} parent=1 // pred_region
      _
    $region17: #{ann_forward_pallas.1} parent=1 // pred_fallthru
      _
    // Predicated region
    $region18: #{ann_forward_pallas.1} parent=1 // pred_check
      _
    $region19: #{ann_forward_pallas.1} parent=1 // pred_check_branch
      %21 = sbr.rel (0) target = $region21
    $region20: #{ann_forward_pallas.1} parent=1 // pred_region
      _
    $region21: #{ann_forward_pallas.1} parent=1 // pred_fallthru
      _
    %v22 = vld [vmem:[%s0] sm:$0xff]
    %v23 = vld [vmem:[%s1] sm:$0xff]
    %v24 = vld [vmem:[%s2] sm:$0xff]
    %26 = vset.pattern.permute.xlu0 0
    %27 = vperm.xlu0 %26, %v24
    %v28 = vpop.permute.xlu0 %27
    %vm30 = vcmask 261120
    %v32 = vsel %vm30, %v23, 0
    %v35 = vsel %vm30, %v22, 0
    %37 = vmatprep.subr.mxu0 0.0
    %38 = vmatpush1.xpose.msra.mxu0 %v35
    %39 = vmatprep.subr.mxu0 0.0
    %40 = vmatpush1.xpose.msra.mxu0 0.0
    %41 = vmatprep.subr.mxu0 0.0
    %42 = vmatpush1.xpose.msra.mxu0 0.0
    %43 = vmatprep.subr.mxu0 0.0
    %44 = vmatpush1.xpose.msra.mxu0 0.0
    %45 = vmatprep.subr.mxu0 0.0
    %46 = vmatpush1.xpose.msra.mxu0 0.0
    %47 = vmatprep.subr.mxu0 0.0
    %48 = vmatpush1.xpose.msra.mxu0 0.0
    %49 = vmatprep.subr.mxu0 0.0
    %50 = vmatpush1.xpose.msra.mxu0 0.0
    %51 = vmatprep.subr.mxu0 0.0
    %52 = vmatpush1.xpose.msra.mxu0 0.0
    %53 = vmatprep.subr.mxu0 0.0
    %54 = vmatpush1.xpose.msra.mxu0 0.0
    %55 = vmatprep.subr.mxu0 0.0
    %56 = vmatpush1.xpose.msra.mxu0 0.0
    %57 = vmatprep.subr.mxu0 0.0
    %58 = vmatpush1.xpose.msra.mxu0 0.0
    %59 = vmatprep.subr.mxu0 0.0
    %60 = vmatpush1.xpose.msra.mxu0 0.0
    %61 = vmatprep.subr.mxu0 0.0
    %62 = vmatpush1.xpose.msra.mxu0 0.0
    %63 = vmatprep.subr.mxu0 0.0
    %64 = vmatpush1.xpose.msra.mxu0 0.0
    %65 = vmatprep.subr.mxu0 0.0
    %66 = vmatpush1.xpose.msra.mxu0 0.0
    %67 = vmatprep.subr.mxu0 0.0
    %68 = vmatpush1.xpose.msra.mxu0 0.0
    %69 = vmatprep.subr.mxu0 0.0
    %70 = vmatpush1.xpose.msra.mxu0 0.0
    %71 = vmatprep.subr.mxu0 0.0
    %72 = vmatpush1.xpose.msra.mxu0 0.0
    %73 = vmatprep.subr.mxu0 0.0
    %74 = vmatpush1.xpose.msra.mxu0 0.0
    %75 = vmatprep.subr.mxu0 0.0
    %76 = vmatpush1.xpose.msra.mxu0 0.0
    %77 = vmatprep.subr.mxu0 0.0
    %78 = vmatpush1.xpose.msra.mxu0 0.0
    %79 = vmatprep.subr.mxu0 0.0
    %80 = vmatpush1.xpose.msra.mxu0 0.0
    %81 = vmatprep.subr.mxu0 0.0
    %82 = vmatpush1.xpose.msra.mxu0 0.0
    %83 = vmatprep.subr.mxu0 0.0
    %84 = vmatpush1.xpose.msra.mxu0 0.0
    %85 = vmatprep.subr.mxu0 0.0
    %86 = vmatpush1.xpose.msra.mxu0 0.0
    %87 = vmatprep.subr.mxu0 0.0
    %88 = vmatpush1.xpose.msra.mxu0 0.0
    %89 = vmatprep.subr.mxu0 0.0
    %90 = vmatpush1.xpose.msra.mxu0 0.0
    %91 = vmatprep.subr.mxu0 0.0
    %92 = vmatpush1.xpose.msra.mxu0 0.0
    %93 = vmatprep.subr.mxu0 0.0
    %94 = vmatpush1.xpose.msra.mxu0 0.0
    %95 = vmatprep.subr.mxu0 0.0
    %96 = vmatpush1.xpose.msra.mxu0 0.0
    %97 = vmatprep.subr.mxu0 0.0
    %98 = vmatpush1.xpose.msra.mxu0 0.0
    %99 = vmatprep.subr.mxu0 0.0
    %100 = vmatpush1.xpose.msra.mxu0 0.0
    %101 = vmatprep.mubr.f32.mxu0 0.0
    %102 = vmatmul.mubr.f32.gmra.mrb[0].mxu0 %v32
    %v103 = vpop.f32.mrb[0].mxu0
    %v104 = vadd.f32 %v28, %v103
    %v105 = vpop.f32.mrb[0].mxu0
    %106 = vdwg.mxu0
    %v107 = vmax.f32 %v104, 0.0
    %v108 = vld [vmem:[%s3] sm:$0x1]
    %s109 = sld [smem:[#allocation2]]
    %v110 = vstv %s109
    %vm111 = vcmask 64512
    %v113 = vsel %vm111, %v108, 0
    %115 = vmatprep.subr.mxu0 0.0
    %116 = vmatpush1.msra.mxu0 %v107
    %117 = vmatprep.subr.mxu0 0.0
    %118 = vmatpush1.msra.mxu0 0.0
    %119 = vmatprep.subr.mxu0 0.0
    %120 = vmatpush1.msra.mxu0 0.0
    %121 = vmatprep.subr.mxu0 0.0
    %122 = vmatpush1.msra.mxu0 0.0
    %123 = vmatprep.subr.mxu0 0.0
    %124 = vmatpush1.msra.mxu0 0.0
    %125 = vmatprep.subr.mxu0 0.0
    %126 = vmatpush1.msra.mxu0 0.0
    %127 = vmatprep.subr.mxu0 0.0
    %128 = vmatpush1.msra.mxu0 0.0
    %129 = vmatprep.subr.mxu0 0.0
    %130 = vmatpush1.msra.mxu0 0.0
    %131 = vmatprep.subr.mxu0 0.0
    %132 = vmatpush1.msra.mxu0 0.0
    %133 = vmatprep.subr.mxu0 0.0
    %134 = vmatpush1.msra.mxu0 0.0
    %135 = vmatprep.subr.mxu0 0.0
    %136 = vmatpush1.msra.mxu0 0.0
    %137 = vmatprep.subr.mxu0 0.0
    %138 = vmatpush1.msra.mxu0 0.0
    %139 = vmatprep.subr.mxu0 0.0
    %140 = vmatpush1.msra.mxu0 0.0
    %141 = vmatprep.subr.mxu0 0.0
    %142 = vmatpush1.msra.mxu0 0.0
    %143 = vmatprep.subr.mxu0 0.0
    %144 = vmatpush1.msra.mxu0 0.0
    %145 = vmatprep.subr.mxu0 0.0
    %146 = vmatpush1.msra.mxu0 0.0
    %147 = vmatprep.subr.mxu0 0.0
    %148 = vmatpush1.msra.mxu0 0.0
    %149 = vmatprep.subr.mxu0 0.0
    %150 = vmatpush1.msra.mxu0 0.0
    %151 = vmatprep.subr.mxu0 0.0
    %152 = vmatpush1.msra.mxu0 0.0
    %153 = vmatprep.subr.mxu0 0.0
    %154 = vmatpush1.msra.mxu0 0.0
    %155 = vmatprep.subr.mxu0 0.0
    %156 = vmatpush1.msra.mxu0 0.0
    %157 = vmatprep.subr.mxu0 0.0
    %158 = vmatpush1.msra.mxu0 0.0
    %159 = vmatprep.subr.mxu0 0.0
    %160 = vmatpush1.msra.mxu0 0.0
    %161 = vmatprep.subr.mxu0 0.0
    %162 = vmatpush1.msra.mxu0 0.0
    %163 = vmatprep.subr.mxu0 0.0
    %164 = vmatpush1.msra.mxu0 0.0
    %165 = vmatprep.subr.mxu0 0.0
    %166 = vmatpush1.msra.mxu0 0.0
    %167 = vmatprep.subr.mxu0 0.0
    %168 = vmatpush1.msra.mxu0 0.0
    %169 = vmatprep.subr.mxu0 0.0
    %170 = vmatpush1.msra.mxu0 0.0
    %171 = vmatprep.subr.mxu0 0.0
    %172 = vmatpush1.msra.mxu0 0.0
    %173 = vmatprep.subr.mxu0 0.0
    %174 = vmatpush1.msra.mxu0 0.0
    %175 = vmatprep.subr.mxu0 0.0
    %176 = vmatpush1.msra.mxu0 0.0
    %177 = vmatprep.subr.mxu0 0.0
    %178 = vmatpush1.msra.mxu0 0.0
    %179 = vmatprep.mubr.f32.mxu0 0.0
    %180 = vmatmul.mubr.f32.gmra.mrb[0].mxu0 %v113
    %v181 = vpop.f32.mrb[0].mxu0
    %v182 = vadd.f32 %v110, %v181
    %v183 = vpop.f32.mrb[0].mxu0
    %184 = vdwg.mxu0
    %vm185 = vcmask 57344
    %186 = vst.msk [vmem:[#allocation3] sm:$0x1] %vm185, %v182
    // Predicated region
    $region22: #{ann_forward_pallas.1} parent=1 // pred_check
      _
    $region23: #{ann_forward_pallas.1} parent=1 // pred_check_branch
      %188 = sbr.rel (0) target = $region25
    $region24: #{ann_forward_pallas.1} parent=1 // pred_region
      %s190 = ssub.s32 16, 16
      %191 = vsyncadd [#allocation4], %s190
      %s193 = sshll.u32 [#allocation3], 4
      %s194 = int_to_ptr.vmem [resolvable:$true] %s193
      %196 = dma.vmem_to_hbm [thread:$0]  %s194, 16, %s5, [#allocation4]
    $region25: #{ann_forward_pallas.1} parent=1 // pred_fallthru
      _
    // Predicated region
    $region26: #{ann_forward_pallas.1} parent=1 // pred_check
      _
    $region27: #{ann_forward_pallas.1} parent=1 // pred_check_branch
      %198 = sbr.rel (0) target = $region29
    $region28: #{ann_forward_pallas.1} parent=1 // pred_region
      %199 = dma.done [#allocation4], 16
    $region29: #{ann_forward_pallas.1} parent=1 // pred_fallthru
      _
    %200 = vsyncpa [#allocation4], 1

</llo_original>
